<compile_context>
chip_gen: v5e
topology: v5e:2x2
jax: 0.10.0
libtpu: 0.0.40
codegen_flags: <defaults>
</compile_context>

<pallas_src>
import jax
import jax.numpy as jnp
from jax.experimental import pallas as pl
from jax.experimental.pallas import tpu as pltpu

input_dim = 28
hidden_dim = 16
output_dim = 16

PACK = 8                       # batch rows packed per lane-dense row
K1 = PACK * input_dim          # 224 (multiple of 8/16 -> no column padding)
HID = PACK * hidden_dim        # 128
OUT = PACK * output_dim        # 128
assert HID == 128 and OUT == 128, "lane-dense packing requires PACK*dim == 128"

# Row layout of the packed parameter slab (all offsets 16-row aligned so bf16
# sublane-packed slices stay aligned):
BIAS_ROWS = 16
OFF_W2 = K1                    # 224  (w1' rows [0, 224))
OFF_W3 = OFF_W2 + HID          # 352  (w2' rows [224, 352))
OFF_B1 = OFF_W3 + HID          # 480  (w3' rows [352, 480))
OFF_B2 = OFF_B1 + BIAS_ROWS    # 496
OFF_B3 = OFF_B2 + BIAS_ROWS    # 512
P_ROWS = OFF_B3 + BIAS_ROWS    # 528


def mlp_kernel(x_ref, p_ref, o_ref):
    # Cast the x tile to bf16 for the MXU (cheap VPU pass, hidden under DMA).
    x = x_ref[...].astype(jnp.bfloat16)                          # (TBR, 224)
    # Layer 1: (TBR,224) @ (224,128) bf16 MXU, f32 accumulate; bias+ReLU f32.
    h = jnp.dot(x, p_ref[0:OFF_W2, :], preferred_element_type=jnp.float32)
    h = jnp.maximum(h + p_ref[OFF_B1:OFF_B1 + 1, :].astype(jnp.float32), 0.0)
    # Layer 2: (TBR,128) @ (128,128)
    h = jnp.dot(h.astype(jnp.bfloat16), p_ref[OFF_W2:OFF_W3, :],
                preferred_element_type=jnp.float32)
    h = jnp.maximum(h + p_ref[OFF_B2:OFF_B2 + 1, :].astype(jnp.float32), 0.0)
    # Layer 3: (TBR,128) @ (128,128)
    y = jnp.dot(h.astype(jnp.bfloat16), p_ref[OFF_W3:OFF_B1, :],
                preferred_element_type=jnp.float32)
    y = y + p_ref[OFF_B3:OFF_B3 + 1, :].astype(jnp.float32)
    o_ref[...] = y.astype(o_ref.dtype)                           # full-lane store


def pack_params(w1, b1, w2, b2, w3, b3):
    """Pack weights/biases into one lane-dense (528, 128) bf16 array.

    Weights are given as [in, out] (transpose of PyTorch's Linear weight).
    Each weight is expanded to kron(I_PACK, w) so that PACK batch rows are
    processed per lane-dense row; biases are tiled PACK times along lanes.
    """
    eye = jnp.eye(PACK, dtype=jnp.float32)
    W1 = jnp.kron(eye, w1.astype(jnp.float32))        # (224, 128)
    W2 = jnp.kron(eye, w2.astype(jnp.float32))        # (128, 128)
    W3 = jnp.kron(eye, w3.astype(jnp.float32))        # (128, 128)
    B1 = jnp.tile(b1.reshape(1, hidden_dim).astype(jnp.float32), (1, PACK))
    B2 = jnp.tile(b2.reshape(1, hidden_dim).astype(jnp.float32), (1, PACK))
    B3 = jnp.tile(b3.reshape(1, output_dim).astype(jnp.float32), (1, PACK))
    zpad = jnp.zeros((BIAS_ROWS - 1, HID), jnp.float32)
    params = jnp.concatenate([W1, W2, W3, B1, zpad, B2, zpad, B3, zpad], axis=0)
    assert params.shape == (P_ROWS, HID)
    return params.astype(jnp.bfloat16)


def _round_up(n, m):
    return ((n + m - 1) // m) * m


def mlp_pallas(x, params, *, block_rows=1024):
    """x: [B, input_dim], params: pack_params(...) -> [B, output_dim] f32.

    block_rows is in packed rows (1024 packed rows == 8192 batch rows).
    """
    B = x.shape[0]
    rows = pl.cdiv(B, PACK)                 # packed rows needed
    Bp = rows * PACK
    if Bp != B:
        # Only non-multiple-of-8 batches need any padding (small copy).
        x = jnp.pad(x, ((0, Bp - B), (0, 0)))
    xp = x.reshape(rows, K1)                # free reshape when Bp == B

    # Tile size: as large as block_rows (amortize per-grid-step overhead) but
    # capped near rows/2 so the grid has >=2 steps for megacore (v7x).
    tbr = min(_round_up(block_rows, 8), _round_up(rows, 8))
    if rows > 8:
        tbr = min(tbr, _round_up((rows + 1) // 2, 8))
    grid = (pl.cdiv(rows, tbr),)            # ragged last block is masked

    out = pl.pallas_call(
        mlp_kernel,
        out_shape=jax.ShapeDtypeStruct((rows, OUT), jnp.float32),
        grid=grid,
        in_specs=[
            pl.BlockSpec((tbr, K1), lambda i: (i, 0)),       # x tile, pipelined
            pl.BlockSpec((P_ROWS, HID), lambda i: (0, 0)),   # params, VMEM-resident
        ],
        out_specs=pl.BlockSpec((tbr, OUT), lambda i: (i, 0)),
        compiler_params=pltpu.CompilerParams(
            dimension_semantics=("parallel",),   # batch axis split across TCs
            # ~3 MB live at block_rows=1024; set the limit explicitly so
            # bigger sweeps stay inside v5e 16 MiB default / v7x 64 MiB phys.
            vmem_limit_bytes=32 * 1024 * 1024,
        ),
    )(xp, params)

    out = out.reshape(Bp, output_dim)       # free reshape
    return out if Bp == B else out[:B]


def init_linear(key, fan_in, fan_out):
    # Mimic PyTorch nn.Linear default init: U(-1/sqrt(fan_in), 1/sqrt(fan_in))
    kw, kb = jax.random.split(key)
    bound = 1.0 / jnp.sqrt(jnp.float32(fan_in))
    w = jax.random.uniform(kw, (fan_in, fan_out), jnp.float32, -bound, bound)
    b = jax.random.uniform(kb, (1, fan_out), jnp.float32, -bound, bound)
    return w, b


def _ref_mlp(x, w1, b1, w2, b2, w3, b3):
    h = jnp.maximum(x @ w1 + b1, 0.0)
    h = jnp.maximum(h @ w2 + b2, 0.0)
    return h @ w3 + b3


if __name__ == "__main__":
    key = jax.random.PRNGKey(0)
    kx, k1, k2, k3, kx2 = jax.random.split(key, 5)

    w1, b1 = init_linear(k1, input_dim, hidden_dim)
    w2, b2 = init_linear(k2, hidden_dim, hidden_dim)
    w3, b3 = init_linear(k3, hidden_dim, output_dim)
    params = pack_params(w1, b1, w2, b2, w3, b3)

    # Small shape (single tile, B divisible by PACK -> no pad/slice path).
    B = 8
    x = jax.random.normal(kx, (B, input_dim), jnp.float32)
    out = jax.block_until_ready(mlp_pallas(x, params))
    ref = _ref_mlp(x, w1, b1, w2, b2, w3, b3)
    assert out.shape == (B, output_dim)
    assert jnp.allclose(out, ref, atol=5e-2, rtol=5e-2), (
        f"max err {jnp.max(jnp.abs(out - ref))}")

    # Larger, non-multiple-of-PACK batch: exercises the pad path, a multi-step
    # grid and the ragged (masked) last block.
    B2 = 1203
    x2 = jax.random.normal(kx2, (B2, input_dim), jnp.float32)
    out2 = jax.block_until_ready(mlp_pallas(x2, params))
    ref2 = _ref_mlp(x2, w1, b1, w2, b2, w3, b3)
    assert out2.shape == (B2, output_dim)
    assert jnp.allclose(out2, ref2, atol=5e-2, rtol=5e-2), (
        f"max err {jnp.max(jnp.abs(out2 - ref2))}")

    print("KERNEL_OK")
</pallas_src>

<mosaic_0001>
module attributes {stable_mosaic.version = 11 : i64} {
  func.func @mlp_kernel(%arg0: i32, %arg1: memref<8x224xf32, #tpu.memory_space<vmem>>, %arg2: memref<528x128xbf16, #tpu.memory_space<vmem>>, %arg3: memref<8x128xf32, #tpu.memory_space<vmem>>) attributes {dimension_semantics = [#tpu.dimension_semantics<parallel>], iteration_bounds = array<i64: 1>, scalar_prefetch = 0 : i64, scratch_operands = 0 : i64, tpu.core_type = #tpu.core_type<tc>, window_params = [{transform_indices = @transform_0, window_bounds = array<i64: 8, 224>}, {pipeline_mode = #tpu.pipeline_mode<synchronous>, transform_indices = @transform_1, window_bounds = array<i64: 528, 128>}, {transform_indices = @transform_2, window_bounds = array<i64: 8, 128>}]} {
    %c0 = arith.constant 0 : index
    %c0_0 = arith.constant 0 : index
    %0 = vector.load %arg1[%c0, %c0_0] : memref<8x224xf32, #tpu.memory_space<vmem>>, vector<8x224xf32>
    %1 = arith.truncf %0 : vector<8x224xf32> to vector<8x224xbf16>
    %c0_1 = arith.constant 0 : index
    %c0_2 = arith.constant 0 : index
    %2 = vector.load %arg2[%c0_1, %c0_2] : memref<528x128xbf16, #tpu.memory_space<vmem>>, vector<224x128xbf16>
    %cst = arith.constant dense<0.000000e+00> : vector<8x128xf32>
    %3 = tpu.matmul %1, %2, %cst {dimension_numbers = #tpu.dot_dimension_numbers<[1], [0], [0], [1], [0, 0, 1, 1], [], []>} : vector<8x224xbf16>, vector<224x128xbf16>, vector<8x128xf32> -> vector<8x128xf32>
    %c480 = arith.constant 480 : index
    %c0_3 = arith.constant 0 : index
    %4 = vector.load %arg2[%c480, %c0_3] : memref<528x128xbf16, #tpu.memory_space<vmem>>, vector<1x128xbf16>
    %5 = arith.extf %4 : vector<1x128xbf16> to vector<1x128xf32>
    %6 = vector.broadcast %5 : vector<1x128xf32> to vector<8x128xf32>
    %7 = arith.addf %3, %6 : vector<8x128xf32>
    %cst_4 = arith.constant 0.000000e+00 : f32
    %8 = vector.broadcast %cst_4 : f32 to vector<8x128xf32>
    %9 = arith.maximumf %7, %8 : vector<8x128xf32>
    %10 = arith.truncf %9 : vector<8x128xf32> to vector<8x128xbf16>
    %c224 = arith.constant 224 : index
    %c0_5 = arith.constant 0 : index
    %11 = vector.load %arg2[%c224, %c0_5] : memref<528x128xbf16, #tpu.memory_space<vmem>>, vector<128x128xbf16>
    %cst_6 = arith.constant dense<0.000000e+00> : vector<8x128xf32>
    %12 = tpu.matmul %10, %11, %cst_6 {dimension_numbers = #tpu.dot_dimension_numbers<[1], [0], [0], [1], [0, 0, 1, 1], [], []>} : vector<8x128xbf16>, vector<128x128xbf16>, vector<8x128xf32> -> vector<8x128xf32>
    %c496 = arith.constant 496 : index
    %c0_7 = arith.constant 0 : index
    %13 = vector.load %arg2[%c496, %c0_7] : memref<528x128xbf16, #tpu.memory_space<vmem>>, vector<1x128xbf16>
    %14 = arith.extf %13 : vector<1x128xbf16> to vector<1x128xf32>
    %15 = vector.broadcast %14 : vector<1x128xf32> to vector<8x128xf32>
    %16 = arith.addf %12, %15 : vector<8x128xf32>
    %cst_8 = arith.constant 0.000000e+00 : f32
    %17 = vector.broadcast %cst_8 : f32 to vector<8x128xf32>
    %18 = arith.maximumf %16, %17 : vector<8x128xf32>
    %19 = arith.truncf %18 : vector<8x128xf32> to vector<8x128xbf16>
    %c352 = arith.constant 352 : index
    %c0_9 = arith.constant 0 : index
    %20 = vector.load %arg2[%c352, %c0_9] : memref<528x128xbf16, #tpu.memory_space<vmem>>, vector<128x128xbf16>
    %cst_10 = arith.constant dense<0.000000e+00> : vector<8x128xf32>
    %21 = tpu.matmul %19, %20, %cst_10 {dimension_numbers = #tpu.dot_dimension_numbers<[1], [0], [0], [1], [0, 0, 1, 1], [], []>} : vector<8x128xbf16>, vector<128x128xbf16>, vector<8x128xf32> -> vector<8x128xf32>
    %c512 = arith.constant 512 : index
    %c0_11 = arith.constant 0 : index
    %22 = vector.load %arg2[%c512, %c0_11] : memref<528x128xbf16, #tpu.memory_space<vmem>>, vector<1x128xbf16>
    %23 = arith.extf %22 : vector<1x128xbf16> to vector<1x128xf32>
    %24 = vector.broadcast %23 : vector<1x128xf32> to vector<8x128xf32>
    %25 = arith.addf %21, %24 : vector<8x128xf32>
    %c0_12 = arith.constant 0 : index
    %c0_13 = arith.constant 0 : index
    %26 = vector.load %arg3[%c0_12, %c0_13] : memref<8x128xf32, #tpu.memory_space<vmem>>, vector<8x128xf32>
    tpu.vector_store %arg3[%c0_12, %c0_13], %25 {strides = array<i32>} : memref<8x128xf32, #tpu.memory_space<vmem>>, vector<8x128xf32>,
    return
  }
  func.func @transform_0(%arg0: i32) -> (i32, i32) {
    %c0_i32 = arith.constant 0 : i32
    %c0_i32_0 = arith.constant 0 : i32
    return %arg0, %c0_i32 : i32, i32
  }
  func.func @transform_1(%arg0: i32) -> (i32, i32) {
    %c0_i32 = arith.constant 0 : i32
    %c0_i32_0 = arith.constant 0 : i32
    %c0_i32_1 = arith.constant 0 : i32
    return %c0_i32, %c0_i32_0 : i32, i32
  }
  func.func @transform_2(%arg0: i32) -> (i32, i32) {
    %c0_i32 = arith.constant 0 : i32
    %c0_i32_0 = arith.constant 0 : i32
    return %arg0, %c0_i32 : i32, i32
  }
}

</mosaic_0001>

<llo_original>
// kernel: tpu_custom_call.1
$region0: #{tpu_custom_call.1}
  #allocation0 [shape = 'u32[]', space=smem, size = 0x4, offset = 0x4, fixed_abs, tag = 'smem constant byte address 0x4 - core index']
  #allocation1 [shape = 'u32[72,128]{1,0:T(1,128)}', space=vmem, size = 0x9000, scoped, tag = 'internal scratch']
  %s0 = inlined_call_operand.hbm [shape: f32[1,224], index: 0, kind: input, shape index: {}]
  %s1 = inlined_call_operand.hbm [shape: bf16[528,128], index: 1, kind: input, shape index: {}]
  %s2 = inlined_call_operand.hbm [shape: f32[1,128], index: 2, kind: output, shape index: {}]
  %s3 = sld [smem:[#allocation0]]
  $region26: #{tpu_custom_call.1} parent=0
    _
  %s5 = ssub.s32 1, %s3
  %s6 = scalar_select 0, %s5, %s3
  $region1: #{tpu_custom_call.1} parent=0
    #allocation2 [shape = 'u8[8192]{0}', space=vmem, size = 0x2000, scoped, tag = 'input window, operand 0, single buffered']
    #allocation3 [shape = 's32[1]{0}', space=sflag, size = 0x4, scoped, tag = 'scoped memory for tpu_custom_call.1']
    #allocation4 [shape = 's32[1]{0}', space=sflag, size = 0x4, scoped, tag = 'scoped memory for tpu_custom_call.1']
    #allocation5 [shape = 'u8[135168]{0}', space=vmem, size = 0x21000, scoped, tag = 'input window, operand 1, single buffered']
    #allocation6 [shape = 's32[1]{0}', space=sflag, size = 0x4, scoped, tag = 'scoped memory for tpu_custom_call.1']
    #allocation7 [shape = 'u8[4096]{0}', space=vmem, size = 0x1000, scoped, tag = 'output window, operand 0, single buffered']
    %7 = vsyncpa [#allocation3], 0
    %8 = vsyncpa [#allocation6], 0
    %9 = vsyncpa [#allocation4], 0
    // Predicated region
    $region2: #{tpu_custom_call.1} parent=1 // pred_check
      _
    $region3: #{tpu_custom_call.1} parent=1 // pred_check_branch
      %11 = sbr.rel (0) target = $region5
    $region4: #{tpu_custom_call.1} parent=1 // pred_region
      %13 = vsyncadd [#allocation3], 224
      %s14 = sshll.u32 %s0, 4
      %s15 = int_to_ptr.hbm [resolvable:$true] %s14
      %s16 = sshll.u32 [#allocation2], 4
      %s17 = int_to_ptr.vmem [resolvable:$true] %s16
      %22 = dma.hbm_to_vmem [thread:$0]  %s15, 32, %s17, [#allocation3], 32, 32, 2
    $region5: #{tpu_custom_call.1} parent=1 // pred_fallthru
      _
    // Predicated region
    $region6: #{tpu_custom_call.1} parent=1 // pred_check
      _
    $region7: #{tpu_custom_call.1} parent=1 // pred_check_branch
      %24 = sbr.rel (0) target = $region9
    $region8: #{tpu_custom_call.1} parent=1 // pred_region
      %26 = vsyncadd [#allocation6], 0
      %s27 = sshll.u32 %s1, 4
      %s28 = int_to_ptr.hbm [resolvable:$true] %s27
      %s29 = sshll.u32 [#allocation5], 4
      %s30 = int_to_ptr.vmem [resolvable:$true] %s29
      %35 = dma.hbm_to_vmem [thread:$0]  %s28, 4224, %s30, [#allocation6], 64, 64, 4
    $region9: #{tpu_custom_call.1} parent=1 // pred_fallthru
      _
    // Predicated region
    $region10: #{tpu_custom_call.1} parent=1 // pred_check
      _
    $region11: #{tpu_custom_call.1} parent=1 // pred_check_branch
      %37 = sbr.rel (0) target = $region13
    $region12: #{tpu_custom_call.1} parent=1 // pred_region
      %39 = dma.done [#allocation3], 256
    $region13: #{tpu_custom_call.1} parent=1 // pred_fallthru
      _
    // Predicated region
    $region14: #{tpu_custom_call.1} parent=1 // pred_check
      _
    $region15: #{tpu_custom_call.1} parent=1 // pred_check_branch
      %41 = sbr.rel (0) target = $region17
    $region16: #{tpu_custom_call.1} parent=1 // pred_region
      %43 = dma.done [#allocation6], 4224
    $region17: #{tpu_custom_call.1} parent=1 // pred_fallthru
      _
    %v45 = vld [vmem:[#allocation2] sm:$0x3]
    %v46 = vld [vmem:[#allocation2 + $0x2] sm:$0x3]
    %v47 = vld [vmem:[#allocation2 + $0x4] sm:$0x3]
    %v48 = vld [vmem:[#allocation2 + $0x6] sm:$0x3]
    %v49 = vld [vmem:[#allocation2 + $0x8] sm:$0x3]
    %v50 = vld [vmem:[#allocation2 + $0xa] sm:$0x3]
    %v51 = vld [vmem:[#allocation2 + $0xc] sm:$0x3]
    %v52 = vld [vmem:[#allocation2 + $0xe] sm:$0x3]
    %61 = vst [vmem:[#allocation1] ss:$9 sm:$0xff] %v45
    %s62 = scalar_lea.vmem [#allocation1], 1
    %63 = vst [vmem:[%s62] ss:$9 sm:$0xff] %v46
    %s64 = scalar_lea.vmem [#allocation1], 2
    %65 = vst [vmem:[%s64] ss:$9 sm:$0xff] %v47
    %s66 = scalar_lea.vmem [#allocation1], 3
    %67 = vst [vmem:[%s66] ss:$9 sm:$0xff] %v48
    %s68 = scalar_lea.vmem [#allocation1], 4
    %69 = vst [vmem:[%s68] ss:$9 sm:$0xff] %v49
    %s70 = scalar_lea.vmem [#allocation1], 5
    %71 = vst [vmem:[%s70] ss:$9 sm:$0xff] %v50
    %s72 = scalar_lea.vmem [#allocation1], 6
    %73 = vst [vmem:[%s72] ss:$9 sm:$0xff] %v51
    %s74 = scalar_lea.vmem [#allocation1], 7
    %75 = vst [vmem:[%s74] ss:$9 sm:$0xff] %v52
    %v76 = vld [vmem:[#allocation1] sm:$0xff]
    %v77 = vld [vmem:[#allocation1 + $0x9] sm:$0xff]
    %v80 = vpack.c.bf16 %v76, %v76
    %v81 = vpack.c.bf16 %v77, %v77
    %v82 = vld [vmem:[#allocation5] sm:$0xf]
    %v83 = vld [vmem:[#allocation5 + $0x4] sm:$0xf]
    %v84 = vld [vmem:[#allocation5 + $0x8] sm:$0xf]
    %v85 = vld [vmem:[#allocation5 + $0xc] sm:$0xf]
    %v86 = vld [vmem:[#allocation5 + $0x10] sm:$0xf]
    %v87 = vld [vmem:[#allocation5 + $0x14] sm:$0xf]
    %v88 = vld [vmem:[#allocation5 + $0x18] sm:$0xf]
    %v89 = vld [vmem:[#allocation5 + $0x1c] sm:$0xf]
    %v90 = vld [vmem:[#allocation5 + $0x20] sm:$0xf]
    %v91 = vld [vmem:[#allocation5 + $0x24] sm:$0xf]
    %v92 = vld [vmem:[#allocation5 + $0x28] sm:$0xf]
    %v93 = vld [vmem:[#allocation5 + $0x2c] sm:$0xf]
    %v94 = vld [vmem:[#allocation5 + $0x30] sm:$0xf]
    %v95 = vld [vmem:[#allocation5 + $0x34] sm:$0xf]
    %v96 = vld [vmem:[#allocation5 + $0x38] sm:$0xf]
    %v97 = vld [vmem:[#allocation5 + $0x3c] sm:$0xf]
    %v98 = vld [vmem:[#allocation5 + $0x40] sm:$0xf]
    %v99 = vld [vmem:[#allocation5 + $0x44] sm:$0xf]
    %v100 = vld [vmem:[#allocation5 + $0x48] sm:$0xf]
    %v101 = vld [vmem:[#allocation5 + $0x4c] sm:$0xf]
    %v102 = vld [vmem:[#allocation5 + $0x50] sm:$0xf]
    %v103 = vld [vmem:[#allocation5 + $0x54] sm:$0xf]
    %v104 = vld [vmem:[#allocation5 + $0x58] sm:$0xf]
    %v105 = vld [vmem:[#allocation5 + $0x5c] sm:$0xf]
    %v106 = vld [vmem:[#allocation5 + $0x60] sm:$0xf]
    %v107 = vld [vmem:[#allocation5 + $0x64] sm:$0xf]
    %v108 = vld [vmem:[#allocation5 + $0x68] sm:$0xf]
    %v109 = vld [vmem:[#allocation5 + $0x6c] sm:$0xf]
    %v110 = vld [vmem:[#allocation5 + $0xf0] sm:$0x1]
    %v111 = vunpack.c.l.bf16 %v110
    %v112 = vperm.slane %v111, 0
    %v141 = vunpack.c.l.b16 %v82
    %v142 = vunpack.c.l.b16 %v83
    %v143 = vunpack.c.l.b16 %v84
    %v144 = vunpack.c.l.b16 %v85
    %v145 = vunpack.c.l.b16 %v86
    %v146 = vunpack.c.l.b16 %v87
    %v147 = vunpack.c.l.b16 %v88
    %v148 = vunpack.c.l.b16 %v89
    %v149 = vunpack.c.l.b16 %v90
    %v150 = vunpack.c.l.b16 %v91
    %v151 = vunpack.c.l.b16 %v92
    %v152 = vunpack.c.l.b16 %v93
    %v153 = vunpack.c.l.b16 %v94
    %v154 = vunpack.c.l.b16 %v95
    %v155 = vunpack.c.l.b16 %v96
    %v156 = vunpack.c.l.b16 %v97
    %v157 = vunpack.c.l.b16 %v98
    %v158 = vunpack.c.l.b16 %v99
    %v159 = vunpack.c.l.b16 %v100
    %v160 = vunpack.c.l.b16 %v101
    %v161 = vunpack.c.l.b16 %v102
    %v162 = vunpack.c.l.b16 %v103
    %v163 = vunpack.c.l.b16 %v104
    %v164 = vunpack.c.l.b16 %v105
    %v165 = vunpack.c.l.b16 %v106
    %v166 = vunpack.c.l.b16 %v107
    %v167 = vunpack.c.l.b16 %v108
    %v168 = vunpack.c.l.b16 %v109
    %v169 = vpack.c.b16 %v142, %v141
    %v170 = vpack.c.b16 %v144, %v143
    %v171 = vpack.c.b16 %v146, %v145
    %v172 = vpack.c.b16 %v148, %v147
    %v173 = vpack.c.b16 %v150, %v149
    %v174 = vpack.c.b16 %v152, %v151
    %v175 = vpack.c.b16 %v154, %v153
    %v176 = vpack.c.b16 %v156, %v155
    %v177 = vpack.c.b16 %v158, %v157
    %v178 = vpack.c.b16 %v160, %v159
    %v179 = vpack.c.b16 %v162, %v161
    %v180 = vpack.c.b16 %v164, %v163
    %v181 = vpack.c.b16 %v166, %v165
    %v182 = vpack.c.b16 %v168, %v167
    %vm197 = vcmask 785408
    %v199 = vsel %vm197, %v81, 0
    %201 = vmatpush.bf16.msra.mxu0 %v176
    %202 = vmatpush.bf16.msra.mxu0 %v175
    %203 = vmatpush.bf16.msra.mxu0 %v174
    %204 = vmatpush.bf16.msra.mxu0 %v173
    %205 = vmatpush.bf16.msra.mxu0 %v172
    %206 = vmatpush.bf16.msra.mxu0 %v171
    %207 = vmatpush.bf16.msra.mxu0 %v170
    %208 = vmatpush.bf16.msra.mxu0 %v169
    %209 = vmatmul.bf16.gmra.mxu0 %v80
    %v210 = vpop.f32.mrf.mxu0
    %v211 = vadd.f32 %v112, %v210
    %v212 = vpop.f32.mrf.mxu0
    %213 = vdwg.mxu0
    %214 = vmatpush.bf16.msra.mxu0 0
    %215 = vmatpush.bf16.msra.mxu0 0
    %216 = vmatpush.bf16.msra.mxu0 %v182
    %217 = vmatpush.bf16.msra.mxu0 %v181
    %218 = vmatpush.bf16.msra.mxu0 %v180
    %219 = vmatpush.bf16.msra.mxu0 %v179
    %220 = vmatpush.bf16.msra.mxu0 %v178
    %221 = vmatpush.bf16.msra.mxu0 %v177
    %222 = vmatmul.bf16.gmra.mxu0 %v199
    %v223 = vpop.f32.mrf.mxu0
    %v224 = vadd.f32 %v211, %v223
    %v225 = vpop.f32.mrf.mxu0
    %226 = vdwg.mxu0
    %v227 = vmax.f32 %v224, 0.0
    %v228 = vpack.c.bf16 %v227, %v227
    %v229 = vld [vmem:[#allocation5 + $0x70] sm:$0xf]
    %v230 = vld [vmem:[#allocation5 + $0x74] sm:$0xf]
    %v231 = vld [vmem:[#allocation5 + $0x78] sm:$0xf]
    %v232 = vld [vmem:[#allocation5 + $0x7c] sm:$0xf]
    %v233 = vld [vmem:[#allocation5 + $0x80] sm:$0xf]
    %v234 = vld [vmem:[#allocation5 + $0x84] sm:$0xf]
    %v235 = vld [vmem:[#allocation5 + $0x88] sm:$0xf]
    %v236 = vld [vmem:[#allocation5 + $0x8c] sm:$0xf]
    %v237 = vld [vmem:[#allocation5 + $0x90] sm:$0xf]
    %v238 = vld [vmem:[#allocation5 + $0x94] sm:$0xf]
    %v239 = vld [vmem:[#allocation5 + $0x98] sm:$0xf]
    %v240 = vld [vmem:[#allocation5 + $0x9c] sm:$0xf]
    %v241 = vld [vmem:[#allocation5 + $0xa0] sm:$0xf]
    %v242 = vld [vmem:[#allocation5 + $0xa4] sm:$0xf]
    %v243 = vld [vmem:[#allocation5 + $0xa8] sm:$0xf]
    %v244 = vld [vmem:[#allocation5 + $0xac] sm:$0xf]
    %v245 = vld [vmem:[#allocation5 + $0xf8] sm:$0x1]
    %v246 = vunpack.c.l.bf16 %v245
    %v247 = vperm.slane %v246, 0
    %v264 = vunpack.c.l.b16 %v229
    %v265 = vunpack.c.l.b16 %v230
    %v266 = vunpack.c.l.b16 %v231
    %v267 = vunpack.c.l.b16 %v232
    %v268 = vunpack.c.l.b16 %v233
    %v269 = vunpack.c.l.b16 %v234
    %v270 = vunpack.c.l.b16 %v235
    %v271 = vunpack.c.l.b16 %v236
    %v272 = vunpack.c.l.b16 %v237
    %v273 = vunpack.c.l.b16 %v238
    %v274 = vunpack.c.l.b16 %v239
    %v275 = vunpack.c.l.b16 %v240
    %v276 = vunpack.c.l.b16 %v241
    %v277 = vunpack.c.l.b16 %v242
    %v278 = vunpack.c.l.b16 %v243
    %v279 = vunpack.c.l.b16 %v244
    %v280 = vpack.c.b16 %v265, %v264
    %v281 = vpack.c.b16 %v267, %v266
    %v282 = vpack.c.b16 %v269, %v268
    %v283 = vpack.c.b16 %v271, %v270
    %v284 = vpack.c.b16 %v273, %v272
    %v285 = vpack.c.b16 %v275, %v274
    %v286 = vpack.c.b16 %v277, %v276
    %v287 = vpack.c.b16 %v279, %v278
    %296 = vmatpush.bf16.msra.mxu0 %v287
    %297 = vmatpush.bf16.msra.mxu0 %v286
    %298 = vmatpush.bf16.msra.mxu0 %v285
    %299 = vmatpush.bf16.msra.mxu0 %v284
    %300 = vmatpush.bf16.msra.mxu0 %v283
    %301 = vmatpush.bf16.msra.mxu0 %v282
    %302 = vmatpush.bf16.msra.mxu0 %v281
    %303 = vmatpush.bf16.msra.mxu0 %v280
    %304 = vmatmul.bf16.gmra.mxu0 %v228
    %v305 = vpop.f32.mrf.mxu0
    %v306 = vadd.f32 %v247, %v305
    %v307 = vpop.f32.mrf.mxu0
    %308 = vdwg.mxu0
    %v309 = vmax.f32 %v306, 0.0
    %v310 = vpack.c.bf16 %v309, %v309
    %v311 = vld [vmem:[#allocation5 + $0xb0] sm:$0xf]
    %v312 = vld [vmem:[#allocation5 + $0xb4] sm:$0xf]
    %v313 = vld [vmem:[#allocation5 + $0xb8] sm:$0xf]
    %v314 = vld [vmem:[#allocation5 + $0xbc] sm:$0xf]
    %v315 = vld [vmem:[#allocation5 + $0xc0] sm:$0xf]
    %v316 = vld [vmem:[#allocation5 + $0xc4] sm:$0xf]
    %v317 = vld [vmem:[#allocation5 + $0xc8] sm:$0xf]
    %v318 = vld [vmem:[#allocation5 + $0xcc] sm:$0xf]
    %v319 = vld [vmem:[#allocation5 + $0xd0] sm:$0xf]
    %v320 = vld [vmem:[#allocation5 + $0xd4] sm:$0xf]
    %v321 = vld [vmem:[#allocation5 + $0xd8] sm:$0xf]
    %v322 = vld [vmem:[#allocation5 + $0xdc] sm:$0xf]
    %v323 = vld [vmem:[#allocation5 + $0xe0] sm:$0xf]
    %v324 = vld [vmem:[#allocation5 + $0xe4] sm:$0xf]
    %v325 = vld [vmem:[#allocation5 + $0xe8] sm:$0xf]
    %v326 = vld [vmem:[#allocation5 + $0xec] sm:$0xf]
    %v327 = vld [vmem:[#allocation5 + $0x100] sm:$0x1]
    %v328 = vunpack.c.l.bf16 %v327
    %v329 = vperm.slane %v328, 0
    %v346 = vunpack.c.l.b16 %v311
    %v347 = vunpack.c.l.b16 %v312
    %v348 = vunpack.c.l.b16 %v313
    %v349 = vunpack.c.l.b16 %v314
    %v350 = vunpack.c.l.b16 %v315
    %v351 = vunpack.c.l.b16 %v316
    %v352 = vunpack.c.l.b16 %v317
    %v353 = vunpack.c.l.b16 %v318
    %v354 = vunpack.c.l.b16 %v319
    %v355 = vunpack.c.l.b16 %v320
    %v356 = vunpack.c.l.b16 %v321
    %v357 = vunpack.c.l.b16 %v322
    %v358 = vunpack.c.l.b16 %v323
    %v359 = vunpack.c.l.b16 %v324
    %v360 = vunpack.c.l.b16 %v325
    %v361 = vunpack.c.l.b16 %v326
    %v362 = vpack.c.b16 %v347, %v346
    %v363 = vpack.c.b16 %v349, %v348
    %v364 = vpack.c.b16 %v351, %v350
    %v365 = vpack.c.b16 %v353, %v352
    %v366 = vpack.c.b16 %v355, %v354
    %v367 = vpack.c.b16 %v357, %v356
    %v368 = vpack.c.b16 %v359, %v358
    %v369 = vpack.c.b16 %v361, %v360
    %378 = vmatpush.bf16.msra.mxu0 %v369
    %379 = vmatpush.bf16.msra.mxu0 %v368
    %380 = vmatpush.bf16.msra.mxu0 %v367
    %381 = vmatpush.bf16.msra.mxu0 %v366
    %382 = vmatpush.bf16.msra.mxu0 %v365
    %383 = vmatpush.bf16.msra.mxu0 %v364
    %384 = vmatpush.bf16.msra.mxu0 %v363
    %385 = vmatpush.bf16.msra.mxu0 %v362
    %386 = vmatmul.bf16.gmra.mxu0 %v310
    %v387 = vpop.f32.mrf.mxu0
    %v388 = vadd.f32 %v329, %v387
    %v389 = vpop.f32.mrf.mxu0
    %390 = vdwg.mxu0
    %391 = vst [vmem:[#allocation7] sm:$0xff] %v388
    // Predicated region
    $region18: #{tpu_custom_call.1} parent=1 // pred_check
      _
    $region19: #{tpu_custom_call.1} parent=1 // pred_check_branch
      %393 = sbr.rel (0) target = $region21
    $region20: #{tpu_custom_call.1} parent=1 // pred_region
      %395 = vsyncadd [#allocation4], 112
      %s396 = sshll.u32 [#allocation7], 4
      %s397 = int_to_ptr.vmem [resolvable:$true] %s396
      %s398 = sshll.u32 %s2, 4
      %s399 = int_to_ptr.hbm [resolvable:$true] %s398
      %404 = dma.vmem_to_hbm [thread:$0]  %s397, 16, %s399, [#allocation4], 16, 16, 1
    $region21: #{tpu_custom_call.1} parent=1 // pred_fallthru
      _
    // Predicated region
    $region22: #{tpu_custom_call.1} parent=1 // pred_check
      _
    $region23: #{tpu_custom_call.1} parent=1 // pred_check_branch
      %406 = sbr.rel (0) target = $region25
    $region24: #{tpu_custom_call.1} parent=1 // pred_region
      %408 = dma.done [#allocation4], 128
    $region25: #{tpu_custom_call.1} parent=1 // pred_fallthru
      _
    %409 = vsyncpa [#allocation3], 1
    %410 = vsyncpa [#allocation6], 1
    %411 = vsyncpa [#allocation4], 1

</llo_original>
